<compile_context>
chip_gen: v7x
topology: tpu7x:2x2x1
jax: 0.10.0
libtpu: 0.0.40
codegen_flags: <defaults>
</compile_context>

<pallas_src>
import functools

import jax
import jax.numpy as jnp
from jax.experimental import pallas as pl
from jax.experimental.pallas import tpu as pltpu

D_IN, D_HID, D_OUT = 1024, 50, 10
HID_PAD = 128
EPS = 1e-5

_VMEM_LIMIT = 32 * 1024 * 1024      # scoped VMEM request (safe on v5e/v6e/v7x)
_FUSED_MAX_ROWS = 32 * 1024         # bf16 h scratch cap (~8 MiB) for the fused path


def _prep_params(w1, gamma, beta, w2, b2):
    """bf16 weights padded to lane-dense shapes + packed f32 small vectors."""
    w1p = jnp.zeros((D_IN, HID_PAD), jnp.bfloat16)
    w1p = w1p.at[:, :D_HID].set(w1.astype(jnp.bfloat16))              # [1024, 128]
    w2p = jnp.zeros((HID_PAD, D_OUT), jnp.bfloat16)
    w2p = w2p.at[:D_HID, :].set(w2.astype(jnp.bfloat16))              # [128, 10]
    params = jnp.zeros((3, HID_PAD), jnp.float32)                     # [gamma; beta; b2]
    params = params.at[0, :D_HID].set(gamma.astype(jnp.float32))
    params = params.at[1, :D_HID].set(beta.astype(jnp.float32))
    params = params.at[2, :D_OUT].set(b2.astype(jnp.float32))
    return w1p, w2p, params


def _pad_rows(x, n_pad):
    n = x.shape[0]
    return x if n == n_pad else jnp.pad(x, ((0, n_pad - n), (0, 0)))


# ----------------------------------------------------------------------------
# Tier 1: small N — whole batch resident, single un-gridded kernel.
# ----------------------------------------------------------------------------
def _single_tile_kernel(x_ref, w1_ref, params_ref, w2_ref, o_ref):
    # fc1 (bias omitted: cancels exactly under training-mode BatchNorm)
    h = jnp.dot(x_ref[...], w1_ref[...],
                preferred_element_type=jnp.float32)                   # [N, 128] f32

    inv_n = 1.0 / x_ref.shape[0]
    mean = jnp.sum(h, axis=0, keepdims=True) * inv_n
    var = jnp.maximum(
        jnp.sum(h * h, axis=0, keepdims=True) * inv_n - mean * mean, 0.0)

    gamma = params_ref[0:1, :]
    beta = params_ref[1:2, :]
    scale = gamma * jax.lax.rsqrt(var + EPS)                          # EUP
    shift = beta - mean * scale
    hn = jnp.maximum(h * scale + shift, 0.0).astype(jnp.bfloat16)     # BN + ReLU

    b2 = params_ref[2:3, :D_OUT]
    o_ref[...] = jnp.dot(hn, w2_ref[...],
                         preferred_element_type=jnp.float32) + b2     # [N, 10] f32


def label_predictor_single_tile(x, w1, gamma, beta, w2, b2):
    n = x.shape[0]
    xb = x.astype(jnp.bfloat16)
    w1p, w2p, params = _prep_params(w1, gamma, beta, w2, b2)

    vmem = pl.BlockSpec(memory_space=pltpu.MemorySpace.VMEM)
    cost = pl.CostEstimate(
        flops=2 * n * D_IN * HID_PAD + 2 * n * HID_PAD * D_OUT,
        transcendentals=HID_PAD,
        bytes_accessed=2 * (xb.size + w1p.size + w2p.size)
        + 4 * (params.size + n * D_OUT),
    )
    return pl.pallas_call(
        _single_tile_kernel,
        out_shape=jax.ShapeDtypeStruct((n, D_OUT), jnp.float32),
        in_specs=[vmem, vmem, vmem, vmem],
        out_specs=vmem,
        cost_estimate=cost,
        compiler_params=pltpu.CompilerParams(vmem_limit_bytes=_VMEM_LIMIT),
    )(xb, w1p, params, w2p)


# ----------------------------------------------------------------------------
# Tier 2: mid N — single fused two-phase kernel, h kept in a VMEM scratch slab
# (no HBM roundtrip for h, no second launch, x DMA pipelined per tile).
# ----------------------------------------------------------------------------
def _fused_kernel(x_ref, w1_ref, params_ref, w2_ref, o_ref, h_scr, stats_scr,
                  *, true_n, tile_n):
    p = pl.program_id(0)   # phase: 0 = fc1 + stats, 1 = BN + ReLU + fc2
    i = pl.program_id(1)   # batch tile

    @pl.when(jnp.logical_and(p == 0, i == 0))
    def _():
        stats_scr[...] = jnp.zeros_like(stats_scr)

    @pl.when(p == 0)
    def _():
        h = jnp.dot(x_ref[...], w1_ref[...],
                    preferred_element_type=jnp.float32)               # f32 stats source
        stats_scr[0:1, :] += jnp.sum(h, axis=0, keepdims=True)
        stats_scr[1:2, :] += jnp.sum(h * h, axis=0, keepdims=True)
        row0 = pl.multiple_of(i * tile_n, tile_n)
        h_scr[pl.ds(row0, tile_n), :] = h.astype(h_scr.dtype)         # bf16 slab

    @pl.when(p == 1)
    def _():
        inv_n = 1.0 / true_n                                          # TRUE n: zero pad rows add 0
        mean = stats_scr[0:1, :] * inv_n
        var = jnp.maximum(stats_scr[1:2, :] * inv_n - mean * mean, 0.0)
        scale = params_ref[0:1, :] * jax.lax.rsqrt(var + EPS)
        shift = params_ref[1:2, :] - mean * scale
        row0 = pl.multiple_of(i * tile_n, tile_n)
        h = h_scr[pl.ds(row0, tile_n), :].astype(jnp.float32)
        hn = jnp.maximum(h * scale + shift, 0.0).astype(jnp.bfloat16)
        b2 = params_ref[2:3, :D_OUT]
        o_ref[...] = jnp.dot(hn, w2_ref[...],
                             preferred_element_type=jnp.float32) + b2


def label_predictor_fused(x, w1, gamma, beta, w2, b2, *, tile_n=1024):
    n = x.shape[0]
    n_pad = ((n + tile_n - 1) // tile_n) * tile_n
    n_tiles = n_pad // tile_n
    xb = _pad_rows(x.astype(jnp.bfloat16), n_pad)
    w1p, w2p, params = _prep_params(w1, gamma, beta, w2, b2)

    kernel = functools.partial(_fused_kernel, true_n=float(n), tile_n=tile_n)
    cost = pl.CostEstimate(
        flops=2 * n_pad * D_IN * HID_PAD + 2 * n_pad * HID_PAD * D_OUT,
        transcendentals=HID_PAD,
        bytes_accessed=2 * (xb.size + w1p.size + w2p.size)
        + 4 * (params.size + n_pad * D_OUT),
    )
    out = pl.pallas_call(
        kernel,
        out_shape=jax.ShapeDtypeStruct((n_pad, D_OUT), jnp.float32),
        grid=(2, n_tiles),
        in_specs=[
            # phase 0 streams x tiles; phase 1 pins tile 0 (stays resident).
            pl.BlockSpec((tile_n, D_IN), lambda p, i: ((1 - p) * i, 0)),
            pl.BlockSpec((D_IN, HID_PAD), lambda p, i: (0, 0)),
            pl.BlockSpec((3, HID_PAD), lambda p, i: (0, 0)),
            pl.BlockSpec((HID_PAD, D_OUT), lambda p, i: (0, 0)),
        ],
        # output blocks only advance (and flush) during phase 1.
        out_specs=pl.BlockSpec((tile_n, D_OUT), lambda p, i: (p * i, 0)),
        scratch_shapes=[pltpu.VMEM((n_pad, HID_PAD), jnp.bfloat16),
                        pltpu.VMEM((2, HID_PAD), jnp.float32)],
        compiler_params=pltpu.CompilerParams(
            dimension_semantics=("arbitrary", "arbitrary"),
            vmem_limit_bytes=_VMEM_LIMIT),
        cost_estimate=cost,
    )(xb, w1p, params, w2p)
    return out[:n] if n_pad != n else out


# ----------------------------------------------------------------------------
# Tier 3: large N — two-pass path (bf16 h through HBM).  Pass 1 gets an outer
# "parallel" axis with per-core partial stats so both v7x TensorCores stream x.
# ----------------------------------------------------------------------------
def _fc1_stats_kernel(x_ref, w1_ref, h_ref, stats_ref):
    i = pl.program_id(1)

    @pl.when(i == 0)
    def _():
        stats_ref[...] = jnp.zeros_like(stats_ref)

    h = jnp.dot(x_ref[...], w1_ref[...],
                preferred_element_type=jnp.float32)                   # [tile_n, 128] f32
    stats_ref[0:1, :] += jnp.sum(h, axis=0, keepdims=True)
    stats_ref[1:2, :] += jnp.sum(h * h, axis=0, keepdims=True)
    h_ref[...] = h.astype(h_ref.dtype)                                # bf16 to HBM


def _bn_relu_fc2_kernel(h_ref, params2_ref, w2_ref, o_ref):
    scale = params2_ref[0:1, :]
    shift = params2_ref[1:2, :]
    b2 = params2_ref[2:3, :D_OUT]
    hn = jnp.maximum(h_ref[...].astype(jnp.float32) * scale + shift, 0.0)
    o_ref[...] = jnp.dot(hn.astype(jnp.bfloat16), w2_ref[...],
                         preferred_element_type=jnp.float32) + b2


def label_predictor_two_pass(x, w1, gamma, beta, w2, b2, *, tile_n=1024):
    n = x.shape[0]
    n_pad = ((n + tile_n - 1) // tile_n) * tile_n
    n_tiles = n_pad // tile_n
    nc = 2 if n_tiles % 2 == 0 else 1          # 2 partials -> both v7x TCs; free on 1-TC chips
    tiles_per_core = n_tiles // nc
    xb = _pad_rows(x.astype(jnp.bfloat16), n_pad)
    w1p, w2p, params = _prep_params(w1, gamma, beta, w2, b2)

    def x_map(c, i):
        return (c * tiles_per_core + i, 0)

    def h_map(c, i):
        return (c * tiles_per_core + i, 0)

    cost1 = pl.CostEstimate(
        flops=2 * n_pad * D_IN * HID_PAD,
        transcendentals=0,
        bytes_accessed=2 * (xb.size + w1p.size) + 2 * n_pad * HID_PAD
        + 4 * nc * 2 * HID_PAD,
    )
    h, stats = pl.pallas_call(
        _fc1_stats_kernel,
        out_shape=(jax.ShapeDtypeStruct((n_pad, HID_PAD), jnp.bfloat16),
                   jax.ShapeDtypeStruct((nc, 2, HID_PAD), jnp.float32)),
        grid=(nc, tiles_per_core),
        in_specs=[pl.BlockSpec((tile_n, D_IN), x_map),
                  pl.BlockSpec((D_IN, HID_PAD), lambda c, i: (0, 0))],
        out_specs=(pl.BlockSpec((tile_n, HID_PAD), h_map),
                   pl.BlockSpec((None, 2, HID_PAD), lambda c, i: (c, 0, 0))),
        compiler_params=pltpu.CompilerParams(
            dimension_semantics=("parallel", "arbitrary"),
            vmem_limit_bytes=_VMEM_LIMIT),
        cost_estimate=cost1,
    )(xb, w1p)

    # Whole-batch BN fold (tiny [1,128] XLA math).  Divide by the TRUE n —
    # zero-padded rows contribute exactly 0 to both sums (no fc1 bias).
    s = jnp.sum(stats, axis=0)
    mean = s[0:1] / n
    var = jnp.maximum(s[1:2] / n - mean * mean, 0.0)
    scale = params[0:1] * jax.lax.rsqrt(var + EPS)
    shift = params[1:2] - mean * scale
    params2 = jnp.concatenate([scale, shift, params[2:3]], axis=0)    # [3, 128]

    cost2 = pl.CostEstimate(
        flops=2 * n_pad * HID_PAD * D_OUT + 4 * n_pad * HID_PAD,
        transcendentals=0,
        bytes_accessed=2 * (n_pad * HID_PAD + w2p.size)
        + 4 * (params2.size + n_pad * D_OUT),
    )
    out = pl.pallas_call(
        _bn_relu_fc2_kernel,
        out_shape=jax.ShapeDtypeStruct((n_pad, D_OUT), jnp.float32),
        grid=(n_tiles,),
        in_specs=[pl.BlockSpec((tile_n, HID_PAD), lambda i: (i, 0)),
                  pl.BlockSpec((3, HID_PAD), lambda i: (0, 0)),
                  pl.BlockSpec((HID_PAD, D_OUT), lambda i: (0, 0))],
        out_specs=pl.BlockSpec((tile_n, D_OUT), lambda i: (i, 0)),
        compiler_params=pltpu.CompilerParams(
            dimension_semantics=("parallel",),
            vmem_limit_bytes=_VMEM_LIMIT),
        cost_estimate=cost2,
    )(h, params2, w2p)
    return out[:n] if n_pad != n else out


# ----------------------------------------------------------------------------
# Dispatch.
# ----------------------------------------------------------------------------
def label_predictor(x, w1, gamma, beta, w2, b2, *, tile_n=1024):
    n = x.shape[0]
    if n <= tile_n:
        return label_predictor_single_tile(x, w1, gamma, beta, w2, b2)
    n_pad = ((n + tile_n - 1) // tile_n) * tile_n
    if n_pad <= _FUSED_MAX_ROWS:
        return label_predictor_fused(x, w1, gamma, beta, w2, b2, tile_n=tile_n)
    return label_predictor_two_pass(x, w1, gamma, beta, w2, b2, tile_n=tile_n)


# ----------------------------------------------------------------------------
# Pure-JAX f32 reference (faithful to the PyTorch module, fc1 bias included —
# it provably cancels under training-mode BatchNorm).
# ----------------------------------------------------------------------------
def reference(x, w1, b1, gamma, beta, w2, b2):
    h = x @ w1 + b1
    mean = jnp.mean(h, axis=0, keepdims=True)
    var = jnp.mean((h - mean) ** 2, axis=0, keepdims=True)            # biased var
    h = (h - mean) * jax.lax.rsqrt(var + EPS)
    h = h * gamma + beta
    h = jnp.maximum(h, 0.0)
    return h @ w2 + b2


if __name__ == "__main__":
    key = jax.random.PRNGKey(0)
    ks = jax.random.split(key, 8)

    # PyTorch-style init, weights pre-transposed to [in, out].
    lim1 = 1.0 / jnp.sqrt(jnp.float32(D_IN))
    w1 = jax.random.uniform(ks[1], (D_IN, D_HID), jnp.float32, -lim1, lim1)
    b1 = jax.random.uniform(ks[2], (D_HID,), jnp.float32, -lim1, lim1)  # ref-only: cancels under BN
    gamma = 1.0 + 0.1 * jax.random.normal(ks[3], (D_HID,), jnp.float32)
    beta = 0.1 * jax.random.normal(ks[4], (D_HID,), jnp.float32)
    lim2 = 1.0 / jnp.sqrt(jnp.float32(D_HID))
    w2 = jax.random.uniform(ks[5], (D_HID, D_OUT), jnp.float32, -lim2, lim2)
    b2 = jax.random.uniform(ks[6], (D_OUT,), jnp.float32, -lim2, lim2)

    # Tier 1: small batch, single-tile path (bf16 matmuls -> loosened tolerance).
    N = 8
    x = jax.random.normal(ks[0], (N, D_IN), jnp.float32)
    out = jax.block_until_ready(label_predictor(x, w1, gamma, beta, w2, b2))
    ref = reference(x, w1, b1, gamma, beta, w2, b2)
    assert out.shape == (N, D_OUT), out.shape
    assert jnp.allclose(out, ref, atol=5e-2, rtol=5e-2), "single-tile mismatch"

    # Tier 2: fused two-phase kernel, N NOT a multiple of tile_n (zero-row pad).
    N2, TILE = 200, 64
    x2 = jax.random.normal(ks[7], (N2, D_IN), jnp.float32)
    out2 = jax.block_until_ready(
        label_predictor(x2, w1, gamma, beta, w2, b2, tile_n=TILE))
    ref2 = reference(x2, w1, b1, gamma, beta, w2, b2)
    assert out2.shape == (N2, D_OUT), out2.shape
    assert jnp.allclose(out2, ref2, atol=5e-2, rtol=5e-2), "fused mismatch"

    # Tier 3: two-pass path (exercises per-core partial stats + padding).
    out3 = jax.block_until_ready(
        label_predictor_two_pass(x2, w1, gamma, beta, w2, b2, tile_n=TILE))
    assert out3.shape == (N2, D_OUT), out3.shape
    assert jnp.allclose(out3, ref2, atol=5e-2, rtol=5e-2), "two-pass mismatch"

    print("KERNEL_OK")
</pallas_src>

<mosaic_0001>
module attributes {stable_mosaic.version = 11 : i64} {
  func.func @_single_tile_kernel(%arg0: memref<8x1024xbf16, #tpu.memory_space<vmem>>, %arg1: memref<1024x128xbf16, #tpu.memory_space<vmem>>, %arg2: memref<3x128xf32, #tpu.memory_space<vmem>>, %arg3: memref<128x10xbf16, #tpu.memory_space<vmem>>, %arg4: memref<8x10xf32, #tpu.memory_space<vmem>>) attributes {dimension_semantics = [], scalar_prefetch = 0 : i64, scratch_operands = 0 : i64, tpu.core_type = #tpu.core_type<tc>} {
    %c0 = arith.constant 0 : index
    %c0_0 = arith.constant 0 : index
    %0 = vector.load %arg0[%c0, %c0_0] : memref<8x1024xbf16, #tpu.memory_space<vmem>>, vector<8x1024xbf16>
    %c0_1 = arith.constant 0 : index
    %c0_2 = arith.constant 0 : index
    %1 = vector.load %arg1[%c0_1, %c0_2] : memref<1024x128xbf16, #tpu.memory_space<vmem>>, vector<1024x128xbf16>
    %cst = arith.constant dense<0.000000e+00> : vector<8x128xf32>
    %2 = tpu.matmul %0, %1, %cst {dimension_numbers = #tpu.dot_dimension_numbers<[1], [0], [0], [1], [0, 0, 1, 1], [], []>} : vector<8x1024xbf16>, vector<1024x128xbf16>, vector<8x128xf32> -> vector<8x128xf32>
    %cst_3 = arith.constant dense<0.000000e+00> : vector<128xf32>
    %3 = vector.multi_reduction <add>, %2, %cst_3 [0] : vector<8x128xf32> to vector<128xf32>
    %4 = vector.shape_cast %3 : vector<128xf32> to vector<1x128xf32>
    %cst_4 = arith.constant 1.250000e-01 : f32
    %5 = vector.broadcast %cst_4 : f32 to vector<1x128xf32>
    %6 = arith.mulf %4, %5 : vector<1x128xf32>
    %7 = arith.mulf %2, %2 : vector<8x128xf32>
    %cst_5 = arith.constant dense<0.000000e+00> : vector<128xf32>
    %8 = vector.multi_reduction <add>, %7, %cst_5 [0] : vector<8x128xf32> to vector<128xf32>
    %9 = vector.shape_cast %8 : vector<128xf32> to vector<1x128xf32>
    %cst_6 = arith.constant 1.250000e-01 : f32
    %10 = vector.broadcast %cst_6 : f32 to vector<1x128xf32>
    %11 = arith.mulf %9, %10 : vector<1x128xf32>
    %12 = arith.mulf %6, %6 : vector<1x128xf32>
    %13 = arith.subf %11, %12 : vector<1x128xf32>
    %cst_7 = arith.constant 0.000000e+00 : f32
    %14 = vector.broadcast %cst_7 : f32 to vector<1x128xf32>
    %15 = arith.maximumf %13, %14 : vector<1x128xf32>
    %c0_8 = arith.constant 0 : index
    %c0_9 = arith.constant 0 : index
    %16 = vector.load %arg2[%c0_8, %c0_9] : memref<3x128xf32, #tpu.memory_space<vmem>>, vector<1x128xf32>
    %c1 = arith.constant 1 : index
    %c0_10 = arith.constant 0 : index
    %17 = vector.load %arg2[%c1, %c0_10] : memref<3x128xf32, #tpu.memory_space<vmem>>, vector<1x128xf32>
    %cst_11 = arith.constant 9.99999974E-6 : f32
    %18 = vector.broadcast %cst_11 : f32 to vector<1x128xf32>
    %19 = arith.addf %15, %18 : vector<1x128xf32>
    %20 = math.rsqrt %19 : vector<1x128xf32>
    %21 = arith.mulf %16, %20 : vector<1x128xf32>
    %22 = arith.mulf %6, %21 : vector<1x128xf32>
    %23 = arith.subf %17, %22 : vector<1x128xf32>
    %24 = vector.broadcast %21 : vector<1x128xf32> to vector<8x128xf32>
    %25 = arith.mulf %2, %24 : vector<8x128xf32>
    %26 = vector.broadcast %23 : vector<1x128xf32> to vector<8x128xf32>
    %27 = arith.addf %25, %26 : vector<8x128xf32>
    %cst_12 = arith.constant 0.000000e+00 : f32
    %28 = vector.broadcast %cst_12 : f32 to vector<8x128xf32>
    %29 = arith.maximumf %27, %28 : vector<8x128xf32>
    %30 = arith.truncf %29 : vector<8x128xf32> to vector<8x128xbf16>
    %c2 = arith.constant 2 : index
    %c0_13 = arith.constant 0 : index
    %31 = vector.load %arg2[%c2, %c0_13] : memref<3x128xf32, #tpu.memory_space<vmem>>, vector<1x10xf32>
    %c0_14 = arith.constant 0 : index
    %c0_15 = arith.constant 0 : index
    %32 = vector.load %arg3[%c0_14, %c0_15] : memref<128x10xbf16, #tpu.memory_space<vmem>>, vector<128x10xbf16>
    %cst_16 = arith.constant dense<0.000000e+00> : vector<8x10xf32>
    %33 = tpu.matmul %30, %32, %cst_16 {dimension_numbers = #tpu.dot_dimension_numbers<[1], [0], [0], [1], [0, 0, 1, 1], [], []>} : vector<8x128xbf16>, vector<128x10xbf16>, vector<8x10xf32> -> vector<8x10xf32>
    %34 = vector.broadcast %31 : vector<1x10xf32> to vector<8x10xf32>
    %35 = arith.addf %33, %34 : vector<8x10xf32>
    %c0_17 = arith.constant 0 : index
    %c0_18 = arith.constant 0 : index
    %36 = vector.load %arg4[%c0_17, %c0_18] : memref<8x10xf32, #tpu.memory_space<vmem>>, vector<8x10xf32>
    tpu.vector_store %arg4[%c0_17, %c0_18], %35 {strides = array<i32>} : memref<8x10xf32, #tpu.memory_space<vmem>>, vector<8x10xf32>,
    return
  }
}

</mosaic_0001>

<llo_original>
// kernel: tpu_custom_call.1
$region0: #{tpu_custom_call.1}
  #allocation0 [shape = 'u32[]', space=smem, size = 0x4, offset = 0x4, fixed_abs, tag = 'smem constant byte address 0x4 - core index']
  #allocation1 [shape = 'u32[144,128]{1,0:T(1,128)}', space=vmem, size = 0x12000, scoped, tag = 'internal scratch']
  %s0 = inlined_call_operand.vmem [shape: bf16[8,1024], index: 0, kind: input, shape index: {}]
  %s1 = inlined_call_operand.hbm [shape: bf16[1024,128], index: 1, kind: input, shape index: {}]
  %s2 = inlined_call_operand.vmem [shape: f32[3,128], index: 2, kind: input, shape index: {}]
  %s3 = inlined_call_operand.vmem [shape: bf16[128,10], index: 3, kind: input, shape index: {}]
  %s4 = inlined_call_operand.hbm [shape: f32[8,10], index: 4, kind: output, shape index: {}]
  %s5 = sld [smem:[#allocation0]]
  $region30: #{tpu_custom_call.1} parent=0
    _
  %s7 = ssub.s32 1, %s5
  %s8 = scalar_select 0, %s7, %s5
  $region1: #{tpu_custom_call.1} parent=0
    #allocation2 [shape = 'u8[262144]{0}', space=vmem, size = 0x40000, scoped, tag = 'input window, operand 1, single buffered']
    #allocation3 [shape = 's32[1]{0}', space=sflag, size = 0x4, scoped, tag = 'scoped memory for tpu_custom_call.1']
    #allocation4 [shape = 's32[1]{0}', space=sflag, size = 0x4, scoped, tag = 'scoped memory for tpu_custom_call.1']
    #allocation5 [shape = 'u8[4096]{0}', space=vmem, size = 0x1000, scoped, tag = 'output window, operand 0, single buffered']
    %9 = vsyncpa [#allocation3], 0
    %10 = vsyncpa [#allocation4], 0
    // Predicated region
    $region2: #{tpu_custom_call.1} parent=1 // pred_check
      _
    $region3: #{tpu_custom_call.1} parent=1 // pred_check_branch
      %12 = sbr.rel (0) target = $region5
    $region4: #{tpu_custom_call.1} parent=1 // pred_region
      _
    $region5: #{tpu_custom_call.1} parent=1 // pred_fallthru
      _
    // Predicated region
    $region6: #{tpu_custom_call.1} parent=1 // pred_check
      _
    $region7: #{tpu_custom_call.1} parent=1 // pred_check_branch
      %14 = sbr.rel (0) target = $region9
    $region8: #{tpu_custom_call.1} parent=1 // pred_region
      %s16 = ssub.s32 8192, 8192
      %17 = vsyncadd [#allocation3], %s16
      %s18 = sshll.u32 [#allocation2], 4
      %s19 = int_to_ptr.vmem [resolvable:$true] %s18
      %24 = dma.hbm_to_vmem [thread:$0]  %s1, 8192, %s19, [#allocation3], 64, 64, 4
    $region9: #{tpu_custom_call.1} parent=1 // pred_fallthru
      _
    // Predicated region
    $region10: #{tpu_custom_call.1} parent=1 // pred_check
      _
    $region11: #{tpu_custom_call.1} parent=1 // pred_check_branch
      %26 = sbr.rel (0) target = $region13
    $region12: #{tpu_custom_call.1} parent=1 // pred_region
      _
    $region13: #{tpu_custom_call.1} parent=1 // pred_fallthru
      _
    // Predicated region
    $region14: #{tpu_custom_call.1} parent=1 // pred_check
      _
    $region15: #{tpu_custom_call.1} parent=1 // pred_check_branch
      %28 = sbr.rel (0) target = $region17
    $region16: #{tpu_custom_call.1} parent=1 // pred_region
      _
    $region17: #{tpu_custom_call.1} parent=1 // pred_fallthru
      _
    // Predicated region
    $region18: #{tpu_custom_call.1} parent=1 // pred_check
      _
    $region19: #{tpu_custom_call.1} parent=1 // pred_check_branch
      %30 = sbr.rel (0) target = $region21
    $region20: #{tpu_custom_call.1} parent=1 // pred_region
      %31 = dma.done [#allocation3], 8192
    $region21: #{tpu_custom_call.1} parent=1 // pred_fallthru
      _
    %v33 = vld [vmem:[%s0] sm:$0xff]
    %v34 = vld [vmem:[%s0 + $0x8] sm:$0xff]
    %v35 = vld [vmem:[%s0 + $0x10] sm:$0xff]
    %v36 = vld [vmem:[%s0 + $0x18] sm:$0xff]
    %v37 = vld [vmem:[#allocation2] sm:$0xf]
    %v38 = vld [vmem:[#allocation2 + $0x4] sm:$0xf]
    %v39 = vld [vmem:[#allocation2 + $0x8] sm:$0xf]
    %v40 = vld [vmem:[#allocation2 + $0xc] sm:$0xf]
    %v41 = vld [vmem:[#allocation2 + $0x10] sm:$0xf]
    %v42 = vld [vmem:[#allocation2 + $0x14] sm:$0xf]
    %v43 = vld [vmem:[#allocation2 + $0x18] sm:$0xf]
    %v44 = vld [vmem:[#allocation2 + $0x1c] sm:$0xf]
    %v45 = vld [vmem:[#allocation2 + $0x20] sm:$0xf]
    %v46 = vld [vmem:[#allocation2 + $0x24] sm:$0xf]
    %v47 = vld [vmem:[#allocation2 + $0x28] sm:$0xf]
    %v48 = vld [vmem:[#allocation2 + $0x2c] sm:$0xf]
    %v49 = vld [vmem:[#allocation2 + $0x30] sm:$0xf]
    %v50 = vld [vmem:[#allocation2 + $0x34] sm:$0xf]
    %v51 = vld [vmem:[#allocation2 + $0x38] sm:$0xf]
    %v52 = vld [vmem:[#allocation2 + $0x3c] sm:$0xf]
    %v53 = vld [vmem:[#allocation2 + $0x40] sm:$0xf]
    %v54 = vld [vmem:[#allocation2 + $0x44] sm:$0xf]
    %v55 = vld [vmem:[#allocation2 + $0x48] sm:$0xf]
    %v56 = vld [vmem:[#allocation2 + $0x4c] sm:$0xf]
    %v57 = vld [vmem:[#allocation2 + $0x50] sm:$0xf]
    %v58 = vld [vmem:[#allocation2 + $0x54] sm:$0xf]
    %v59 = vld [vmem:[#allocation2 + $0x58] sm:$0xf]
    %v60 = vld [vmem:[#allocation2 + $0x5c] sm:$0xf]
    %v61 = vld [vmem:[#allocation2 + $0x60] sm:$0xf]
    %v62 = vld [vmem:[#allocation2 + $0x64] sm:$0xf]
    %v63 = vld [vmem:[#allocation2 + $0x68] sm:$0xf]
    %v64 = vld [vmem:[#allocation2 + $0x6c] sm:$0xf]
    %v65 = vld [vmem:[#allocation2 + $0x70] sm:$0xf]
    %v66 = vld [vmem:[#allocation2 + $0x74] sm:$0xf]
    %v67 = vld [vmem:[#allocation2 + $0x78] sm:$0xf]
    %v68 = vld [vmem:[#allocation2 + $0x7c] sm:$0xf]
    %v69 = vld [vmem:[#allocation2 + $0x80] sm:$0xf]
    %v70 = vld [vmem:[#allocation2 + $0x84] sm:$0xf]
    %v71 = vld [vmem:[#allocation2 + $0x88] sm:$0xf]
    %v72 = vld [vmem:[#allocation2 + $0x8c] sm:$0xf]
    %v73 = vld [vmem:[#allocation2 + $0x90] sm:$0xf]
    %v74 = vld [vmem:[#allocation2 + $0x94] sm:$0xf]
    %v75 = vld [vmem:[#allocation2 + $0x98] sm:$0xf]
    %v76 = vld [vmem:[#allocation2 + $0x9c] sm:$0xf]
    %v77 = vld [vmem:[#allocation2 + $0xa0] sm:$0xf]
    %v78 = vld [vmem:[#allocation2 + $0xa4] sm:$0xf]
    %v79 = vld [vmem:[#allocation2 + $0xa8] sm:$0xf]
    %v80 = vld [vmem:[#allocation2 + $0xac] sm:$0xf]
    %v81 = vld [vmem:[#allocation2 + $0xb0] sm:$0xf]
    %v82 = vld [vmem:[#allocation2 + $0xb4] sm:$0xf]
    %v83 = vld [vmem:[#allocation2 + $0xb8] sm:$0xf]
    %v84 = vld [vmem:[#allocation2 + $0xbc] sm:$0xf]
    %v85 = vld [vmem:[#allocation2 + $0xc0] sm:$0xf]
    %v86 = vld [vmem:[#allocation2 + $0xc4] sm:$0xf]
    %v87 = vld [vmem:[#allocation2 + $0xc8] sm:$0xf]
    %v88 = vld [vmem:[#allocation2 + $0xcc] sm:$0xf]
    %v89 = vld [vmem:[#allocation2 + $0xd0] sm:$0xf]
    %v90 = vld [vmem:[#allocation2 + $0xd4] sm:$0xf]
    %v91 = vld [vmem:[#allocation2 + $0xd8] sm:$0xf]
    %v92 = vld [vmem:[#allocation2 + $0xdc] sm:$0xf]
    %v93 = vld [vmem:[#allocation2 + $0xe0] sm:$0xf]
    %v94 = vld [vmem:[#allocation2 + $0xe4] sm:$0xf]
    %v95 = vld [vmem:[#allocation2 + $0xe8] sm:$0xf]
    %v96 = vld [vmem:[#allocation2 + $0xec] sm:$0xf]
    %v97 = vld [vmem:[#allocation2 + $0xf0] sm:$0xf]
    %v98 = vld [vmem:[#allocation2 + $0xf4] sm:$0xf]
    %v99 = vld [vmem:[#allocation2 + $0xf8] sm:$0xf]
    %v100 = vld [vmem:[#allocation2 + $0xfc] sm:$0xf]
    %v101 = vld [vmem:[#allocation2 + $0x100] sm:$0xf]
    %v102 = vld [vmem:[#allocation2 + $0x104] sm:$0xf]
    %v103 = vld [vmem:[#allocation2 + $0x108] sm:$0xf]
    %v104 = vld [vmem:[#allocation2 + $0x10c] sm:$0xf]
    %v105 = vld [vmem:[#allocation2 + $0x110] sm:$0xf]
    %v106 = vld [vmem:[#allocation2 + $0x114] sm:$0xf]
    %v107 = vld [vmem:[#allocation2 + $0x118] sm:$0xf]
    %v108 = vld [vmem:[#allocation2 + $0x11c] sm:$0xf]
    %v109 = vld [vmem:[#allocation2 + $0x120] sm:$0xf]
    %v110 = vld [vmem:[#allocation2 + $0x124] sm:$0xf]
    %v111 = vld [vmem:[#allocation2 + $0x128] sm:$0xf]
    %v112 = vld [vmem:[#allocation2 + $0x12c] sm:$0xf]
    %v113 = vld [vmem:[#allocation2 + $0x130] sm:$0xf]
    %v114 = vld [vmem:[#allocation2 + $0x134] sm:$0xf]
    %v115 = vld [vmem:[#allocation2 + $0x138] sm:$0xf]
    %v116 = vld [vmem:[#allocation2 + $0x13c] sm:$0xf]
    %v117 = vld [vmem:[#allocation2 + $0x140] sm:$0xf]
    %v118 = vld [vmem:[#allocation2 + $0x144] sm:$0xf]
    %v119 = vld [vmem:[#allocation2 + $0x148] sm:$0xf]
    %v120 = vld [vmem:[#allocation2 + $0x14c] sm:$0xf]
    %v121 = vld [vmem:[#allocation2 + $0x150] sm:$0xf]
    %v122 = vld [vmem:[#allocation2 + $0x154] sm:$0xf]
    %v123 = vld [vmem:[#allocation2 + $0x158] sm:$0xf]
    %v124 = vld [vmem:[#allocation2 + $0x15c] sm:$0xf]
    %v125 = vld [vmem:[#allocation2 + $0x160] sm:$0xf]
    %v126 = vld [vmem:[#allocation2 + $0x164] sm:$0xf]
    %v127 = vld [vmem:[#allocation2 + $0x168] sm:$0xf]
    %v128 = vld [vmem:[#allocation2 + $0x16c] sm:$0xf]
    %v129 = vld [vmem:[#allocation2 + $0x170] sm:$0xf]
    %v130 = vld [vmem:[#allocation2 + $0x174] sm:$0xf]
    %v131 = vld [vmem:[#allocation2 + $0x178] sm:$0xf]
    %v132 = vld [vmem:[#allocation2 + $0x17c] sm:$0xf]
    %v133 = vld [vmem:[#allocation2 + $0x180] sm:$0xf]
    %v134 = vld [vmem:[#allocation2 + $0x184] sm:$0xf]
    %v135 = vld [vmem:[#allocation2 + $0x188] sm:$0xf]
    %v136 = vld [vmem:[#allocation2 + $0x18c] sm:$0xf]
    %v137 = vld [vmem:[#allocation2 + $0x190] sm:$0xf]
    %v138 = vld [vmem:[#allocation2 + $0x194] sm:$0xf]
    %v139 = vld [vmem:[#allocation2 + $0x198] sm:$0xf]
    %v140 = vld [vmem:[#allocation2 + $0x19c] sm:$0xf]
    %v141 = vld [vmem:[#allocation2 + $0x1a0] sm:$0xf]
    %v142 = vld [vmem:[#allocation2 + $0x1a4] sm:$0xf]
    %v143 = vld [vmem:[#allocation2 + $0x1a8] sm:$0xf]
    %v144 = vld [vmem:[#allocation2 + $0x1ac] sm:$0xf]
    %v145 = vld [vmem:[#allocation2 + $0x1b0] sm:$0xf]
    %v146 = vld [vmem:[#allocation2 + $0x1b4] sm:$0xf]
    %v147 = vld [vmem:[#allocation2 + $0x1b8] sm:$0xf]
    %v148 = vld [vmem:[#allocation2 + $0x1bc] sm:$0xf]
    %v149 = vld [vmem:[#allocation2 + $0x1c0] sm:$0xf]
    %v150 = vld [vmem:[#allocation2 + $0x1c4] sm:$0xf]
    %v151 = vld [vmem:[#allocation2 + $0x1c8] sm:$0xf]
    %v152 = vld [vmem:[#allocation2 + $0x1cc] sm:$0xf]
    %v153 = vld [vmem:[#allocation2 + $0x1d0] sm:$0xf]
    %v154 = vld [vmem:[#allocation2 + $0x1d4] sm:$0xf]
    %v155 = vld [vmem:[#allocation2 + $0x1d8] sm:$0xf]
    %v156 = vld [vmem:[#allocation2 + $0x1dc] sm:$0xf]
    %v157 = vld [vmem:[#allocation2 + $0x1e0] sm:$0xf]
    %v158 = vld [vmem:[#allocation2 + $0x1e4] sm:$0xf]
    %v159 = vld [vmem:[#allocation2 + $0x1e8] sm:$0xf]
    %v160 = vld [vmem:[#allocation2 + $0x1ec] sm:$0xf]
    %v161 = vld [vmem:[#allocation2 + $0x1f0] sm:$0xf]
    %v162 = vld [vmem:[#allocation2 + $0x1f4] sm:$0xf]
    %v163 = vld [vmem:[#allocation2 + $0x1f8] sm:$0xf]
    %v164 = vld [vmem:[#allocation2 + $0x1fc] sm:$0xf]
    %v169 = vunpack.c.l.b16 %v33
    %v170 = vunpack.c.h.b16 %v33
    %v171 = vunpack.c.l.b16 %v34
    %v172 = vunpack.c.h.b16 %v34
    %v173 = vunpack.c.l.b16 %v35
    %v174 = vunpack.c.h.b16 %v35
    %v175 = vunpack.c.l.b16 %v36
    %v176 = vunpack.c.h.b16 %v36
    %v177 = vpack.c.b16 %v169, %v169
    %v178 = vpack.c.b16 %v170, %v170
    %v179 = vpack.c.b16 %v171, %v171
    %v180 = vpack.c.b16 %v172, %v172
    %v181 = vpack.c.b16 %v173, %v173
    %v182 = vpack.c.b16 %v174, %v174
    %v183 = vpack.c.b16 %v175, %v175
    %v184 = vpack.c.b16 %v176, %v176
    %v321 = vunpack.c.l.b16 %v37
    %v322 = vunpack.c.l.b16 %v38
    %v323 = vunpack.c.l.b16 %v39
    %v324 = vunpack.c.l.b16 %v40
    %v325 = vunpack.c.l.b16 %v41
    %v326 = vunpack.c.l.b16 %v42
    %v327 = vunpack.c.l.b16 %v43
    %v328 = vunpack.c.l.b16 %v44
    %v329 = vunpack.c.l.b16 %v45
    %v330 = vunpack.c.l.b16 %v46
    %v331 = vunpack.c.l.b16 %v47
    %v332 = vunpack.c.l.b16 %v48
    %v333 = vunpack.c.l.b16 %v49
    %v334 = vunpack.c.l.b16 %v50
    %v335 = vunpack.c.l.b16 %v51
    %v336 = vunpack.c.l.b16 %v52
    %v337 = vunpack.c.l.b16 %v53
    %v338 = vunpack.c.l.b16 %v54
    %v339 = vunpack.c.l.b16 %v55
    %v340 = vunpack.c.l.b16 %v56
    %v341 = vunpack.c.l.b16 %v57
    %v342 = vunpack.c.l.b16 %v58
    %v343 = vunpack.c.l.b16 %v59
    %v344 = vunpack.c.l.b16 %v60
    %v345 = vunpack.c.l.b16 %v61
    %v346 = vunpack.c.l.b16 %v62
    %v347 = vunpack.c.l.b16 %v63
    %v348 = vunpack.c.l.b16 %v64
    %v349 = vunpack.c.l.b16 %v65
    %v350 = vunpack.c.l.b16 %v66
    %v351 = vunpack.c.l.b16 %v67
    %v352 = vunpack.c.l.b16 %v68
    %v353 = vunpack.c.l.b16 %v69
    %v354 = vunpack.c.l.b16 %v70
    %v355 = vunpack.c.l.b16 %v71
    %v356 = vunpack.c.l.b16 %v72
    %v357 = vunpack.c.l.b16 %v73
    %v358 = vunpack.c.l.b16 %v74
    %v359 = vunpack.c.l.b16 %v75
    %v360 = vunpack.c.l.b16 %v76
    %v361 = vunpack.c.l.b16 %v77
    %v362 = vunpack.c.l.b16 %v78
    %v363 = vunpack.c.l.b16 %v79
    %v364 = vunpack.c.l.b16 %v80
    %v365 = vunpack.c.l.b16 %v81
    %v366 = vunpack.c.l.b16 %v82
    %v367 = vunpack.c.l.b16 %v83
    %v368 = vunpack.c.l.b16 %v84
    %v369 = vunpack.c.l.b16 %v85
    %v370 = vunpack.c.l.b16 %v86
    %v371 = vunpack.c.l.b16 %v87
    %v372 = vunpack.c.l.b16 %v88
    %v373 = vunpack.c.l.b16 %v89
    %v374 = vunpack.c.l.b16 %v90
    %v375 = vunpack.c.l.b16 %v91
    %v376 = vunpack.c.l.b16 %v92
    %v377 = vunpack.c.l.b16 %v93
    %v378 = vunpack.c.l.b16 %v94
    %v379 = vunpack.c.l.b16 %v95
    %v380 = vunpack.c.l.b16 %v96
    %v381 = vunpack.c.l.b16 %v97
    %v382 = vunpack.c.l.b16 %v98
    %v383 = vunpack.c.l.b16 %v99
    %v384 = vunpack.c.l.b16 %v100
    %v385 = vunpack.c.l.b16 %v101
    %v386 = vunpack.c.l.b16 %v102
    %v387 = vunpack.c.l.b16 %v103
    %v388 = vunpack.c.l.b16 %v104
    %v389 = vunpack.c.l.b16 %v105
    %v390 = vunpack.c.l.b16 %v106
    %v391 = vunpack.c.l.b16 %v107
    %v392 = vunpack.c.l.b16 %v108
    %v393 = vunpack.c.l.b16 %v109
    %v394 = vunpack.c.l.b16 %v110
    %v395 = vunpack.c.l.b16 %v111
    %v396 = vunpack.c.l.b16 %v112
    %v397 = vunpack.c.l.b16 %v113
    %v398 = vunpack.c.l.b16 %v114
    %v399 = vunpack.c.l.b16 %v115
    %v400 = vunpack.c.l.b16 %v116
    %v401 = vunpack.c.l.b16 %v117
    %v402 = vunpack.c.l.b16 %v118
    %v403 = vunpack.c.l.b16 %v119
    %v404 = vunpack.c.l.b16 %v120
    %v405 = vunpack.c.l.b16 %v121
    %v406 = vunpack.c.l.b16 %v122
    %v407 = vunpack.c.l.b16 %v123
    %v408 = vunpack.c.l.b16 %v124
    %v409 = vunpack.c.l.b16 %v125
    %v410 = vunpack.c.l.b16 %v126
    %v411 = vunpack.c.l.b16 %v127
    %v412 = vunpack.c.l.b16 %v128
    %v413 = vunpack.c.l.b16 %v129
    %v414 = vunpack.c.l.b16 %v130
    %v415 = vunpack.c.l.b16 %v131
    %v416 = vunpack.c.l.b16 %v132
    %v417 = vunpack.c.l.b16 %v133
    %v418 = vunpack.c.l.b16 %v134
    %v419 = vunpack.c.l.b16 %v135
    %v420 = vunpack.c.l.b16 %v136
    %v421 = vunpack.c.l.b16 %v137
    %v422 = vunpack.c.l.b16 %v138
    %v423 = vunpack.c.l.b16 %v139
    %v424 = vunpack.c.l.b16 %v140
    %v425 = vunpack.c.l.b16 %v141
    %v426 = vunpack.c.l.b16 %v142
    %v427 = vunpack.c.l.b16 %v143
    %v428 = vunpack.c.l.b16 %v144
    %v429 = vunpack.c.l.b16 %v145
    %v430 = vunpack.c.l.b16 %v146
    %v431 = vunpack.c.l.b16 %v147
    %v432 = vunpack.c.l.b16 %v148
    %v433 = vunpack.c.l.b16 %v149
    %v434 = vunpack.c.l.b16 %v150
    %v435 = vunpack.c.l.b16 %v151
    %v436 = vunpack.c.l.b16 %v152
    %v437 = vunpack.c.l.b16 %v153
    %v438 = vunpack.c.l.b16 %v154
    %v439 = vunpack.c.l.b16 %v155
    %v440 = vunpack.c.l.b16 %v156
    %v441 = vunpack.c.l.b16 %v157
    %v442 = vunpack.c.l.b16 %v158
    %v443 = vunpack.c.l.b16 %v159
    %v444 = vunpack.c.l.b16 %v160
    %v445 = vunpack.c.l.b16 %v161
    %v446 = vunpack.c.l.b16 %v162
    %v447 = vunpack.c.l.b16 %v163
    %v448 = vunpack.c.l.b16 %v164
    %v449 = vpack.c.b16 %v322, %v321
    %v450 = vpack.c.b16 %v324, %v323
    %v451 = vpack.c.b16 %v326, %v325
    %v452 = vpack.c.b16 %v328, %v327
    %v453 = vpack.c.b16 %v330, %v329
    %v454 = vpack.c.b16 %v332, %v331
    %v455 = vpack.c.b16 %v334, %v333
    %v456 = vpack.c.b16 %v336, %v335
    %v457 = vpack.c.b16 %v338, %v337
    %v458 = vpack.c.b16 %v340, %v339
    %v459 = vpack.c.b16 %v342, %v341
    %v460 = vpack.c.b16 %v344, %v343
    %v461 = vpack.c.b16 %v346, %v345
    %v462 = vpack.c.b16 %v348, %v347
    %v463 = vpack.c.b16 %v350, %v349
    %v464 = vpack.c.b16 %v352, %v351
    %v465 = vpack.c.b16 %v354, %v353
    %v466 = vpack.c.b16 %v356, %v355
    %v467 = vpack.c.b16 %v358, %v357
    %v468 = vpack.c.b16 %v360, %v359
    %v469 = vpack.c.b16 %v362, %v361
    %v470 = vpack.c.b16 %v364, %v363
    %v471 = vpack.c.b16 %v366, %v365
    %v472 = vpack.c.b16 %v368, %v367
    %v473 = vpack.c.b16 %v370, %v369
    %v474 = vpack.c.b16 %v372, %v371
    %v475 = vpack.c.b16 %v374, %v373
    %v476 = vpack.c.b16 %v376, %v375
    %v477 = vpack.c.b16 %v378, %v377
    %v478 = vpack.c.b16 %v380, %v379
    %v479 = vpack.c.b16 %v382, %v381
    %v480 = vpack.c.b16 %v384, %v383
    %v481 = vpack.c.b16 %v386, %v385
    %v482 = vpack.c.b16 %v388, %v387
    %v483 = vpack.c.b16 %v390, %v389
    %v484 = vpack.c.b16 %v392, %v391
    %v485 = vpack.c.b16 %v394, %v393
    %v486 = vpack.c.b16 %v396, %v395
    %v487 = vpack.c.b16 %v398, %v397
    %v488 = vpack.c.b16 %v400, %v399
    %v489 = vpack.c.b16 %v402, %v401
    %v490 = vpack.c.b16 %v404, %v403
    %v491 = vpack.c.b16 %v406, %v405
    %v492 = vpack.c.b16 %v408, %v407
    %v493 = vpack.c.b16 %v410, %v409
    %v494 = vpack.c.b16 %v412, %v411
    %v495 = vpack.c.b16 %v414, %v413
    %v496 = vpack.c.b16 %v416, %v415
    %v497 = vpack.c.b16 %v418, %v417
    %v498 = vpack.c.b16 %v420, %v419
    %v499 = vpack.c.b16 %v422, %v421
    %v500 = vpack.c.b16 %v424, %v423
    %v501 = vpack.c.b16 %v426, %v425
    %v502 = vpack.c.b16 %v428, %v427
    %v503 = vpack.c.b16 %v430, %v429
    %v504 = vpack.c.b16 %v432, %v431
    %v505 = vpack.c.b16 %v434, %v433
    %v506 = vpack.c.b16 %v436, %v435
    %v507 = vpack.c.b16 %v438, %v437
    %v508 = vpack.c.b16 %v440, %v439
    %v509 = vpack.c.b16 %v442, %v441
    %v510 = vpack.c.b16 %v444, %v443
    %v511 = vpack.c.b16 %v446, %v445
    %v512 = vpack.c.b16 %v448, %v447
    %577 = vmatprep.subr.bf16.mxu0 0
    %578 = vmatpush1.bf16.msra.mxu0 %v449
    %579 = vmatprep.subr.bf16.mxu0 0
    %580 = vmatpush1.bf16.msra.mxu0 %v450
    %581 = vmatprep.subr.bf16.mxu0 0
    %582 = vmatpush1.bf16.msra.mxu0 %v451
    %583 = vmatprep.subr.bf16.mxu0 0
    %584 = vmatpush1.bf16.msra.mxu0 %v452
    %585 = vmatprep.subr.bf16.mxu0 0
    %586 = vmatpush1.bf16.msra.mxu0 %v453
    %587 = vmatprep.subr.bf16.mxu0 0
    %588 = vmatpush1.bf16.msra.mxu0 %v454
    %589 = vmatprep.subr.bf16.mxu0 0
    %590 = vmatpush1.bf16.msra.mxu0 %v455
    %591 = vmatprep.subr.bf16.mxu0 0
    %592 = vmatpush1.bf16.msra.mxu0 %v456
    %593 = vmatprep.subr.bf16.mxu0 0
    %594 = vmatpush1.bf16.msra.mxu0 %v457
    %595 = vmatprep.subr.bf16.mxu0 0
    %596 = vmatpush1.bf16.msra.mxu0 %v458
    %597 = vmatprep.subr.bf16.mxu0 0
    %598 = vmatpush1.bf16.msra.mxu0 %v459
    %599 = vmatprep.subr.bf16.mxu0 0
    %600 = vmatpush1.bf16.msra.mxu0 %v460
    %601 = vmatprep.subr.bf16.mxu0 0
    %602 = vmatpush1.bf16.msra.mxu0 %v461
    %603 = vmatprep.subr.bf16.mxu0 0
    %604 = vmatpush1.bf16.msra.mxu0 %v462
    %605 = vmatprep.subr.bf16.mxu0 0
    %606 = vmatpush1.bf16.msra.mxu0 %v463
    %607 = vmatprep.subr.bf16.mxu0 0
    %608 = vmatpush1.bf16.msra.mxu0 %v464
    %609 = vmatprep.mubr.bf16.mxu0 %v178
    %610 = vmatmul.mubr.bf16.gmra.mrb[0].mxu0 %v177
    %v611 = vpop.f32.mrb[0].mxu0
    %v612 = vadd.f32 0.0, %v611
    %v613 = vpop.f32.mrb[0].mxu0
    %v614 = vpop.f32.mrb[0].mxu0
    %v615 = vpop.f32.mrb[0].mxu0
    %616 = vdwg.mxu0
    %617 = vmatprep.subr.bf16.mxu0 0
    %618 = vmatpush1.bf16.msra.mxu0 %v465
    %619 = vmatprep.subr.bf16.mxu0 0
    %620 = vmatpush1.bf16.msra.mxu0 %v466
    %621 = vmatprep.subr.bf16.mxu0 0
    %622 = vmatpush1.bf16.msra.mxu0 %v467
    %623 = vmatprep.subr.bf16.mxu0 0
    %624 = vmatpush1.bf16.msra.mxu0 %v468
    %625 = vmatprep.subr.bf16.mxu0 0
    %626 = vmatpush1.bf16.msra.mxu0 %v469
    %627 = vmatprep.subr.bf16.mxu0 0
    %628 = vmatpush1.bf16.msra.mxu0 %v470
    %629 = vmatprep.subr.bf16.mxu0 0
    %630 = vmatpush1.bf16.msra.mxu0 %v471
    %631 = vmatprep.subr.bf16.mxu0 0
    %632 = vmatpush1.bf16.msra.mxu0 %v472
    %633 = vmatprep.subr.bf16.mxu0 0
    %634 = vmatpush1.bf16.msra.mxu0 %v473
    %635 = vmatprep.subr.bf16.mxu0 0
    %636 = vmatpush1.bf16.msra.mxu0 %v474
    %637 = vmatprep.subr.bf16.mxu0 0
    %638 = vmatpush1.bf16.msra.mxu0 %v475
    %639 = vmatprep.subr.bf16.mxu0 0
    %640 = vmatpush1.bf16.msra.mxu0 %v476
    %641 = vmatprep.subr.bf16.mxu0 0
    %642 = vmatpush1.bf16.msra.mxu0 %v477
    %643 = vmatprep.subr.bf16.mxu0 0
    %644 = vmatpush1.bf16.msra.mxu0 %v478
    %645 = vmatprep.subr.bf16.mxu0 0
    %646 = vmatpush1.bf16.msra.mxu0 %v479
    %647 = vmatprep.subr.bf16.mxu0 0
    %648 = vmatpush1.bf16.msra.mxu0 %v480
    %649 = vmatprep.mubr.bf16.mxu0 %v180
    %650 = vmatmul.mubr.bf16.gmra.mrb[0].mxu0 %v179
    %v651 = vpop.f32.mrb[0].mxu0
    %v652 = vadd.f32 %v612, %v651
    %v653 = vpop.f32.mrb[0].mxu0
    %v654 = vpop.f32.mrb[0].mxu0
    %v655 = vpop.f32.mrb[0].mxu0
    %656 = vdwg.mxu0
    %657 = vmatprep.subr.bf16.mxu0 0
    %658 = vmatpush1.bf16.msra.mxu0 %v481
    %659 = vmatprep.subr.bf16.mxu0 0
    %660 = vmatpush1.bf16.msra.mxu0 %v482
    %661 = vmatprep.subr.bf16.mxu0 0
    %662 = vmatpush1.bf16.msra.mxu0 %v483
    %663 = vmatprep.subr.bf16.mxu0 0
    %664 = vmatpush1.bf16.msra.mxu0 %v484
    %665 = vmatprep.subr.bf16.mxu0 0
    %666 = vmatpush1.bf16.msra.mxu0 %v485
    %667 = vmatprep.subr.bf16.mxu0 0
    %668 = vmatpush1.bf16.msra.mxu0 %v486
    %669 = vmatprep.subr.bf16.mxu0 0
    %670 = vmatpush1.bf16.msra.mxu0 %v487
    %671 = vmatprep.subr.bf16.mxu0 0
    %672 = vmatpush1.bf16.msra.mxu0 %v488
    %673 = vmatprep.subr.bf16.mxu0 0
    %674 = vmatpush1.bf16.msra.mxu0 %v489
    %675 = vmatprep.subr.bf16.mxu0 0
    %676 = vmatpush1.bf16.msra.mxu0 %v490
    %677 = vmatprep.subr.bf16.mxu0 0
    %678 = vmatpush1.bf16.msra.mxu0 %v491
    %679 = vmatprep.subr.bf16.mxu0 0
    %680 = vmatpush1.bf16.msra.mxu0 %v492
    %681 = vmatprep.subr.bf16.mxu0 0
    %682 = vmatpush1.bf16.msra.mxu0 %v493
    %683 = vmatprep.subr.bf16.mxu0 0
    %684 = vmatpush1.bf16.msra.mxu0 %v494
    %685 = vmatprep.subr.bf16.mxu0 0
    %686 = vmatpush1.bf16.msra.mxu0 %v495
    %687 = vmatprep.subr.bf16.mxu0 0
    %688 = vmatpush1.bf16.msra.mxu0 %v496
    %689 = vmatprep.mubr.bf16.mxu0 %v182
    %690 = vmatmul.mubr.bf16.gmra.mrb[0].mxu0 %v181
    %v691 = vpop.f32.mrb[0].mxu0
    %v692 = vadd.f32 %v652, %v691
    %v693 = vpop.f32.mrb[0].mxu0
    %v694 = vpop.f32.mrb[0].mxu0
    %v695 = vpop.f32.mrb[0].mxu0
    %696 = vdwg.mxu0
    %697 = vmatprep.subr.bf16.mxu0 0
    %698 = vmatpush1.bf16.msra.mxu0 %v497
    %699 = vmatprep.subr.bf16.mxu0 0
    %700 = vmatpush1.bf16.msra.mxu0 %v498
    %701 = vmatprep.subr.bf16.mxu0 0
    %702 = vmatpush1.bf16.msra.mxu0 %v499
    %703 = vmatprep.subr.bf16.mxu0 0
    %704 = vmatpush1.bf16.msra.mxu0 %v500
    %705 = vmatprep.subr.bf16.mxu0 0
    %706 = vmatpush1.bf16.msra.mxu0 %v501
    %707 = vmatprep.subr.bf16.mxu0 0
    %708 = vmatpush1.bf16.msra.mxu0 %v502
    %709 = vmatprep.subr.bf16.mxu0 0
    %710 = vmatpush1.bf16.msra.mxu0 %v503
    %711 = vmatprep.subr.bf16.mxu0 0
    %712 = vmatpush1.bf16.msra.mxu0 %v504
    %713 = vmatprep.subr.bf16.mxu0 0
    %714 = vmatpush1.bf16.msra.mxu0 %v505
    %715 = vmatprep.subr.bf16.mxu0 0
    %716 = vmatpush1.bf16.msra.mxu0 %v506
    %717 = vmatprep.subr.bf16.mxu0 0
    %718 = vmatpush1.bf16.msra.mxu0 %v507
    %719 = vmatprep.subr.bf16.mxu0 0
    %720 = vmatpush1.bf16.msra.mxu0 %v508
    %721 = vmatprep.subr.bf16.mxu0 0
    %722 = vmatpush1.bf16.msra.mxu0 %v509
    %723 = vmatprep.subr.bf16.mxu0 0
    %724 = vmatpush1.bf16.msra.mxu0 %v510
    %725 = vmatprep.subr.bf16.mxu0 0
    %726 = vmatpush1.bf16.msra.mxu0 %v511
    %727 = vmatprep.subr.bf16.mxu0 0
    %728 = vmatpush1.bf16.msra.mxu0 %v512
    %729 = vmatprep.mubr.bf16.mxu0 %v184
    %730 = vmatmul.mubr.bf16.gmra.mrb[0].mxu0 %v183
    %v731 = vpop.f32.mrb[0].mxu0
    %v732 = vadd.f32 %v692, %v731
    %v733 = vpop.f32.mrb[0].mxu0
    %v734 = vpop.f32.mrb[0].mxu0
    %v735 = vpop.f32.mrb[0].mxu0
    %736 = vdwg.mxu0
    %v737 = vrot.slane %v732, 4
    %v738 = vadd.f32 %v732, %v737
    %v739 = vrot.slane %v738, 2
    %v740 = vadd.f32 %v738, %v739
    %v741 = vrot.slane %v740, 1
    %v742 = vadd.f32 %v740, %v741
    %v743 = vmul.f32 %v742, 0.125
    %v744 = vmul.f32 %v732, %v732
    %v745 = vrot.slane %v744, 4
    %v746 = vadd.f32 %v744, %v745
    %v747 = vrot.slane %v746, 2
    %v748 = vadd.f32 %v746, %v747
    %v749 = vrot.slane %v748, 1
    %v750 = vadd.f32 %v748, %v749
    %v751 = vmul.f32 %v750, 0.125
    %v752 = vmul.f32 %v743, %v743
    %v753 = vsub.f32 %v751, %v752
    %v754 = vmax.f32 %v753, 0.0
    %v755 = vld [vmem:[%s2] sm:$0x1]
    %v756 = vld [vmem:[%s2 + $0x1] sm:$0x1]
    %v757 = vadd.f32 %v754, 1e-05
    %v758 = vrsqrt.pop %v757
    %v759 = vmul.f32 %v755, %v758
    %v760 = vmul.f32 %v743, %v759
    %v761 = vsub.f32 %v756, %v760
    %v762 = vlaneseq
    %v763 = vshrl.u32 %v762, 7
    %v764 = vsub.s32 0, %v763
    %v765 = vrot.slane %v759, %v764
    %v766 = vmul.f32 %v732, %v765
    %v767 = vlaneseq
    %v768 = vshrl.u32 %v767, 7
    %v769 = vsub.s32 0, %v768
    %v770 = vrot.slane %v761, %v769
    %v771 = vadd.f32 %v766, %v770
    %v772 = vmax.f32 %v771, 0.0
    %v773 = vpack.c.bf16 %v772, %v772
    %v774 = vld [vmem:[%s2 + $0x2] sm:$0x1]
    %v775 = vld [vmem:[%s3] sm:$0xf]
    %v776 = vld [vmem:[%s3 + $0x4] sm:$0xf]
    %v777 = vld [vmem:[%s3 + $0x8] sm:$0xf]
    %v778 = vld [vmem:[%s3 + $0xc] sm:$0xf]
    %v779 = vld [vmem:[%s3 + $0x10] sm:$0xf]
    %v780 = vld [vmem:[%s3 + $0x14] sm:$0xf]
    %v781 = vld [vmem:[%s3 + $0x18] sm:$0xf]
    %v782 = vld [vmem:[%s3 + $0x1c] sm:$0xf]
    %v783 = vld [vmem:[%s3 + $0x20] sm:$0xf]
    %v784 = vld [vmem:[%s3 + $0x24] sm:$0xf]
    %v785 = vld [vmem:[%s3 + $0x28] sm:$0xf]
    %v786 = vld [vmem:[%s3 + $0x2c] sm:$0xf]
    %v787 = vld [vmem:[%s3 + $0x30] sm:$0xf]
    %v788 = vld [vmem:[%s3 + $0x34] sm:$0xf]
    %v789 = vld [vmem:[%s3 + $0x38] sm:$0xf]
    %v790 = vld [vmem:[%s3 + $0x3c] sm:$0xf]
    %v791 = vlaneseq
    %v792 = vshrl.u32 %v791, 7
    %v793 = vsub.s32 0, %v792
    %v794 = vrot.slane %v774, %v793
    %v811 = vunpack.c.l.b16 %v775
    %v812 = vunpack.c.l.b16 %v776
    %v813 = vunpack.c.l.b16 %v777
    %v814 = vunpack.c.l.b16 %v778
    %v815 = vunpack.c.l.b16 %v779
    %v816 = vunpack.c.l.b16 %v780
    %v817 = vunpack.c.l.b16 %v781
    %v818 = vunpack.c.l.b16 %v782
    %v819 = vunpack.c.l.b16 %v783
    %v820 = vunpack.c.l.b16 %v784
    %v821 = vunpack.c.l.b16 %v785
    %v822 = vunpack.c.l.b16 %v786
    %v823 = vunpack.c.l.b16 %v787
    %v824 = vunpack.c.l.b16 %v788
    %v825 = vunpack.c.l.b16 %v789
    %v826 = vunpack.c.l.b16 %v790
    %v827 = vpack.c.b16 %v812, %v811
    %v828 = vpack.c.b16 %v814, %v813
    %v829 = vpack.c.b16 %v816, %v815
    %v830 = vpack.c.b16 %v818, %v817
    %v831 = vpack.c.b16 %v820, %v819
    %v832 = vpack.c.b16 %v822, %v821
    %v833 = vpack.c.b16 %v824, %v823
    %v834 = vpack.c.b16 %v826, %v825
    %843 = vmatprep.subr.bf16.mxu0 0
    %844 = vmatpush1.bf16.msra.mxu0 %v827
    %845 = vmatprep.subr.bf16.mxu0 0
    %846 = vmatpush1.bf16.msra.mxu0 %v828
    %847 = vmatprep.subr.bf16.mxu0 0
    %848 = vmatpush1.bf16.msra.mxu0 %v829
    %849 = vmatprep.subr.bf16.mxu0 0
    %850 = vmatpush1.bf16.msra.mxu0 %v830
    %851 = vmatprep.subr.bf16.mxu0 0
    %852 = vmatpush1.bf16.msra.mxu0 %v831
    %853 = vmatprep.subr.bf16.mxu0 0
    %854 = vmatpush1.bf16.msra.mxu0 %v832
    %855 = vmatprep.subr.bf16.mxu0 0
    %856 = vmatpush1.bf16.msra.mxu0 %v833
    %857 = vmatprep.subr.bf16.mxu0 0
    %858 = vmatpush1.bf16.msra.mxu0 %v834
    %859 = vmatprep.subr.bf16.mxu0 0
    %860 = vmatpush1.bf16.msra.mxu0 0
    %861 = vmatprep.subr.bf16.mxu0 0
    %862 = vmatpush1.bf16.msra.mxu0 0
    %863 = vmatprep.subr.bf16.mxu0 0
    %864 = vmatpush1.bf16.msra.mxu0 0
    %865 = vmatprep.subr.bf16.mxu0 0
    %866 = vmatpush1.bf16.msra.mxu0 0
    %867 = vmatprep.subr.bf16.mxu0 0
    %868 = vmatpush1.bf16.msra.mxu0 0
    %869 = vmatprep.subr.bf16.mxu0 0
    %870 = vmatpush1.bf16.msra.mxu0 0
    %871 = vmatprep.subr.bf16.mxu0 0
    %872 = vmatpush1.bf16.msra.mxu0 0
    %873 = vmatprep.subr.bf16.mxu0 0
    %874 = vmatpush1.bf16.msra.mxu0 0
    %875 = vmatprep.mubr.bf16.mxu0 0
    %876 = vmatmul.mubr.bf16.gmra.mrb[0].mxu0 %v773
    %v877 = vpop.f32.mrb[0].mxu0
    %v878 = vadd.f32 %v794, %v877
    %v879 = vpop.f32.mrb[0].mxu0
    %v880 = vpop.f32.mrb[0].mxu0
    %v881 = vpop.f32.mrb[0].mxu0
    %882 = vdwg.mxu0
    %vm883 = vcmask 80896
    %884 = vst.msk [vmem:[#allocation5] sm:$0xff] %vm883, %v878
    // Predicated region
    $region22: #{tpu_custom_call.1} parent=1 // pred_check
      _
    $region23: #{tpu_custom_call.1} parent=1 // pred_check_branch
      %886 = sbr.rel (0) target = $region25
    $region24: #{tpu_custom_call.1} parent=1 // pred_region
      %s888 = ssub.s32 128, 128
      %889 = vsyncadd [#allocation4], %s888
      %s891 = sshll.u32 [#allocation5], 4
      %s892 = int_to_ptr.vmem [resolvable:$true] %s891
      %894 = dma.vmem_to_hbm [thread:$0]  %s892, 128, %s4, [#allocation4]
    $region25: #{tpu_custom_call.1} parent=1 // pred_fallthru
      _
    // Predicated region
    $region26: #{tpu_custom_call.1} parent=1 // pred_check
      _
    $region27: #{tpu_custom_call.1} parent=1 // pred_check_branch
      %896 = sbr.rel (0) target = $region29
    $region28: #{tpu_custom_call.1} parent=1 // pred_region
      %897 = dma.done [#allocation4], 128
    $region29: #{tpu_custom_call.1} parent=1 // pred_fallthru
      _
    %898 = vsyncpa [#allocation3], 1
    %899 = vsyncpa [#allocation4], 1

</llo_original>
